<compile_context>
chip_gen: v7x
topology: tpu7x:2x2x1
jax: 0.10.0
libtpu: 0.0.40
codegen_flags: <defaults>
</compile_context>

<pallas_src>
import functools

import jax
import jax.numpy as jnp
from jax.experimental import pallas as pl
from jax.experimental.pallas import tpu as pltpu


def _round_up(x, m):
    return (x + m - 1) // m * m


def _cdiv(a, b):
    return (a + b - 1) // b


def _vmem_budget_bytes():
    """Per-TensorCore VMEM budget (with headroom for compiler scratch)."""
    try:
        cap = int(pltpu.get_tpu_info().vmem_capacity_bytes)
    except Exception:
        cap = 64 << 20  # conservative fallback: v7x per-TC VMEM
    return min(cap * 2 // 3, 96 << 20)


def _pick_tile(num_bbox, vis_dim, word_size, vmem_budget, tile_rows):
    """Largest lane-aligned row tile that fits the VMEM budget."""
    if tile_rows is None and num_bbox <= 64:
        # Tiny problem: single sublane-aligned block, launch-latency bound anyway.
        return _round_up(max(num_bbox, 1), 8)

    if tile_rows is not None:
        tile = max(128, _round_up(tile_rows, 128))
    else:
        # Memory-bound kernel: size the tile to VMEM.
        #   streamed f32 block, double-buffered : 2 * vis_dim * 4   bytes/row
        #   f32 intermediates (x, x*x, x*fcw)   : ~3 * word_size * 4 bytes/row
        #   optional bf16 copy of the block     : vis_dim * 2        bytes/row
        per_row = 2 * vis_dim * 4 + 3 * word_size * 4 + vis_dim * 2
        resident = word_size * vis_dim * 4 + 4 * word_size * 4 + (64 << 10)
        avail = max(vmem_budget - resident, 128 * per_row)
        tile = (avail // per_row) // 128 * 128
        tile = max(128, min(tile, 32768))
        # v7x megacore: keep >= 2 grid steps when the problem is big enough to
        # split, so both TensorCores get work under the "parallel" semantics.
        if num_bbox > 256:
            tile = min(tile, max(128, _round_up(_cdiv(num_bbox, 2), 128)))

    # Never tile wider than the lane-rounded problem itself.
    tile = min(tile, _round_up(max(num_bbox, 1), 128))
    return max(tile, 128)


def _make_kernel(matmul_dtype, tile, num_bbox, needs_mask):
    def kernel(v_ref, w_ref, bw_ref, fcw_ref, fcb_ref, o_ref):
        # Streamed block arrives in the caller's f32; cast right before the MXU.
        v = v_ref[...].astype(matmul_dtype)                     # (T, V)

        # x^T = (emb ⊙ W) @ v^T + emb ⊙ b : contract vis_dim (last dim of both
        # operands, trans-B on the MXU — no per-step relayout).
        mapped_t = jax.lax.dot_general(
            w_ref[...], v,
            dimension_numbers=(((1,), (1,)), ((), ())),
            preferred_element_type=jnp.float32,
        )                                                       # (H, T) f32
        x = mapped_t + bw_ref[...]                              # (H, T) f32

        # Per-box squared L2 norm and fc dot product: sublane reductions.
        sq = jnp.sum(x * x, axis=0, keepdims=True)              # (1, T)
        fc = jnp.sum(x * fcw_ref[...], axis=0, keepdims=True)   # (1, T)

        # F.normalize(..., p=2, dim=1) == x / max(||x||, 1e-12).  fc is linear,
        # so scale the (1, T) logits by rsqrt(max(sq, 1e-24)) instead of
        # dividing the (H, T) tile.  Must stay f32 (1e-24 flushes in bf16).
        inv_norm = jax.lax.rsqrt(jnp.maximum(sq, 1e-24))
        logits = fc * inv_norm + fcb_ref[0]                     # (1, T)

        if needs_mask:
            # Partial blocks read unspecified rows; zero the invalid lanes so
            # nothing non-finite is ever stored (they are sliced off anyway).
            lane = jax.lax.broadcasted_iota(jnp.int32, logits.shape, 1)
            valid = (pl.program_id(0) * tile + lane) < num_bbox
            logits = jnp.where(valid, logits, 0.0)

        o_ref[...] = logits                                     # lane-dense store

    return kernel


def single_score(visual_feats, embedding, W_weight, W_bias, fc_weight, fc_bias,
                 *, matmul_dtype=jnp.float32, tile_rows=None):
    """
    visual_feats: (num_bbox, vis_dim) float32
    embedding:    (word_size,)        float32
    W_weight:     (word_size, vis_dim)   -- PyTorch Linear layout (not transposed)
    W_bias:       (word_size,)
    fc_weight:    (1, word_size)         -- PyTorch Linear layout
    fc_bias:      (1,)
    returns logits (num_bbox,) float32

    matmul_dtype=float32 (default) matches the PyTorch reference; bf16 is an
    MXU-throughput option only (HBM traffic is identical).
    """
    visual_feats = jnp.asarray(visual_feats, jnp.float32)   # no-op if already f32
    num_bbox, vis_dim = visual_feats.shape
    word_size = W_weight.shape[0]

    budget = _vmem_budget_bytes()
    tile = _pick_tile(num_bbox, vis_dim, word_size, budget, tile_rows)
    grid_steps = _cdiv(num_bbox, tile)
    n_pad = grid_steps * tile
    needs_mask = n_pad != num_bbox

    # Fold the embedding gate into the resident weight/bias (one-time O(H*V) on
    # a small, VMEM-resident operand):  (Wv + b)*emb == (emb⊙W)v + emb⊙b.
    emb = jnp.asarray(embedding, jnp.float32)
    w = (emb[:, None] * jnp.asarray(W_weight, jnp.float32)).astype(matmul_dtype)
    bw = (emb * jnp.asarray(W_bias, jnp.float32)).reshape(word_size, 1)
    fcw = jnp.asarray(fc_weight, jnp.float32).reshape(word_size, 1)
    fcb = jnp.asarray(fc_bias, jnp.float32).reshape(1)

    grid_spec = pltpu.PrefetchScalarGridSpec(
        num_scalar_prefetch=0,
        grid=(grid_steps,),
        in_specs=[
            pl.BlockSpec((tile, vis_dim), lambda i: (i, 0)),        # streamed f32 tiles
            pl.BlockSpec((word_size, vis_dim), lambda i: (0, 0)),   # resident W'
            pl.BlockSpec((word_size, 1), lambda i: (0, 0)),         # resident b'
            pl.BlockSpec((word_size, 1), lambda i: (0, 0)),         # resident fc weight
            pl.BlockSpec(memory_space=pltpu.MemorySpace.SMEM),      # fc bias scalar
        ],
        out_specs=pl.BlockSpec((1, tile), lambda i: (0, i)),        # lane-dense logits
    )

    out = pl.pallas_call(
        _make_kernel(matmul_dtype, tile, num_bbox, needs_mask),
        out_shape=jax.ShapeDtypeStruct((1, n_pad), jnp.float32),
        grid_spec=grid_spec,
        compiler_params=pltpu.CompilerParams(
            dimension_semantics=("parallel",),
            vmem_limit_bytes=budget,
        ),
    )(visual_feats, w, bw, fcw, fcb)

    return out[0, :num_bbox]


def single_score_ref(visual_feats, embedding, W_weight, W_bias, fc_weight, fc_bias):
    mapped = visual_feats @ W_weight.T + W_bias
    x = mapped * embedding[None, :]
    norm = jnp.maximum(jnp.sqrt(jnp.sum(x * x, axis=1, keepdims=True)), 1e-12)
    out = x / norm
    return (out @ fc_weight.T + fc_bias)[:, 0]


if __name__ == "__main__":
    key = jax.random.PRNGKey(0)
    num_bbox, vis_dim, word_size = 8, 32, 32

    k1, k2, k3, k4, k5, k6, k7, k8 = jax.random.split(key, 8)
    visual_feats = jax.random.normal(k1, (num_bbox, vis_dim), jnp.float32)
    embedding = jax.random.normal(k2, (word_size,), jnp.float32)
    # deterministic parameter init (synthetic; no checkpoint load)
    W_weight = jax.random.normal(k3, (word_size, vis_dim), jnp.float32) * 0.1
    W_bias = jax.random.normal(k4, (word_size,), jnp.float32) * 0.1
    fc_weight = jax.random.normal(k5, (1, word_size), jnp.float32) * 0.1
    fc_bias = jax.random.normal(k6, (1,), jnp.float32) * 0.1

    ref = single_score_ref(visual_feats, embedding, W_weight, W_bias, fc_weight, fc_bias)

    # Default f32 path: matches the PyTorch reference.
    logits = single_score(visual_feats, embedding, W_weight, W_bias, fc_weight, fc_bias)
    logits = jax.block_until_ready(logits)
    assert logits.shape == (num_bbox,)
    assert jnp.allclose(logits, ref, atol=1e-4, rtol=1e-4), (logits, ref)

    # Optional bf16-MXU path.
    logits_bf16 = single_score(visual_feats, embedding, W_weight, W_bias,
                               fc_weight, fc_bias, matmul_dtype=jnp.bfloat16)
    logits_bf16 = jax.block_until_ready(logits_bf16)
    assert jnp.allclose(logits_bf16, ref, atol=3e-2, rtol=3e-2), (logits_bf16, ref)

    # Single partial block (N=50 -> tile=56): exercises unpadded ragged reads +
    # in-kernel lane masking.
    n_mid = 50
    visual_mid = jax.random.normal(k7, (n_mid, vis_dim), jnp.float32)
    ref_mid = single_score_ref(visual_mid, embedding, W_weight, W_bias, fc_weight, fc_bias)
    logits_mid = single_score(visual_mid, embedding, W_weight, W_bias, fc_weight, fc_bias)
    logits_mid = jax.block_until_ready(logits_mid)
    assert logits_mid.shape == (n_mid,)
    assert jnp.allclose(logits_mid, ref_mid, atol=1e-4, rtol=1e-4), "partial-block mismatch"

    # Multi-step grid with a partial last tile (N=300, tile=128 -> 3 steps):
    # exercises pipelined streamed tiles, megacore-splittable grid, masking.
    big_n = 300
    visual_big = jax.random.normal(k8, (big_n, vis_dim), jnp.float32)
    ref_big = single_score_ref(visual_big, embedding, W_weight, W_bias, fc_weight, fc_bias)
    logits_big = single_score(visual_big, embedding, W_weight, W_bias,
                              fc_weight, fc_bias, tile_rows=128)
    logits_big = jax.block_until_ready(logits_big)
    assert logits_big.shape == (big_n,)
    assert jnp.allclose(logits_big, ref_big, atol=1e-4, rtol=1e-4), "multi-tile mismatch"

    print("KERNEL_OK")
</pallas_src>

<mosaic_0001>
module attributes {stable_mosaic.version = 11 : i64} {
  func.func @kernel(%arg0: i32, %arg1: memref<8x32xf32, #tpu.memory_space<vmem>>, %arg2: memref<32x32xf32, #tpu.memory_space<vmem>>, %arg3: memref<32x1xf32, #tpu.memory_space<vmem>>, %arg4: memref<32x1xf32, #tpu.memory_space<vmem>>, %arg5: memref<1xf32, #tpu.memory_space<smem>>, %arg6: memref<1x8xf32, #tpu.memory_space<vmem>>) attributes {dimension_semantics = [#tpu.dimension_semantics<parallel>], iteration_bounds = array<i64: 1>, scalar_prefetch = 0 : i64, scratch_operands = 0 : i64, tpu.core_type = #tpu.core_type<tc>, window_params = [{transform_indices = @transform_0, window_bounds = array<i64: 8, 32>}, {pipeline_mode = #tpu.pipeline_mode<synchronous>, transform_indices = @transform_1, window_bounds = array<i64: 32, 32>}, {pipeline_mode = #tpu.pipeline_mode<synchronous>, transform_indices = @transform_2, window_bounds = array<i64: 32, 1>}, {pipeline_mode = #tpu.pipeline_mode<synchronous>, transform_indices = @transform_3, window_bounds = array<i64: 32, 1>}, {transform_indices = @transform_4, window_bounds = array<i64: 1>}, {transform_indices = @transform_5, window_bounds = array<i64: 1, 8>}]} {
    %c0 = arith.constant 0 : index
    %c0_0 = arith.constant 0 : index
    %0 = vector.load %arg1[%c0, %c0_0] : memref<8x32xf32, #tpu.memory_space<vmem>>, vector<8x32xf32>
    %c0_1 = arith.constant 0 : index
    %c0_2 = arith.constant 0 : index
    %1 = vector.load %arg2[%c0_1, %c0_2] : memref<32x32xf32, #tpu.memory_space<vmem>>, vector<32x32xf32>
    %cst = arith.constant dense<0.000000e+00> : vector<32x8xf32>
    %2 = tpu.matmul %1, %0, %cst {dimension_numbers = #tpu.dot_dimension_numbers<[1], [1], [0], [0], [0, 0, 1, 0], [], []>} : vector<32x32xf32>, vector<8x32xf32>, vector<32x8xf32> -> vector<32x8xf32>
    %c0_3 = arith.constant 0 : index
    %c0_4 = arith.constant 0 : index
    %3 = vector.load %arg3[%c0_3, %c0_4] : memref<32x1xf32, #tpu.memory_space<vmem>>, vector<32x1xf32>
    %4 = vector.broadcast %3 : vector<32x1xf32> to vector<32x8xf32>
    %5 = arith.addf %2, %4 : vector<32x8xf32>
    %6 = arith.mulf %5, %5 : vector<32x8xf32>
    %cst_5 = arith.constant dense<0.000000e+00> : vector<8xf32>
    %7 = vector.multi_reduction <add>, %6, %cst_5 [0] : vector<32x8xf32> to vector<8xf32>
    %8 = vector.shape_cast %7 : vector<8xf32> to vector<1x8xf32>
    %c0_6 = arith.constant 0 : index
    %c0_7 = arith.constant 0 : index
    %9 = vector.load %arg4[%c0_6, %c0_7] : memref<32x1xf32, #tpu.memory_space<vmem>>, vector<32x1xf32>
    %10 = vector.broadcast %9 : vector<32x1xf32> to vector<32x8xf32>
    %11 = arith.mulf %5, %10 : vector<32x8xf32>
    %cst_8 = arith.constant dense<0.000000e+00> : vector<8xf32>
    %12 = vector.multi_reduction <add>, %11, %cst_8 [0] : vector<32x8xf32> to vector<8xf32>
    %13 = vector.shape_cast %12 : vector<8xf32> to vector<1x8xf32>
    %cst_9 = arith.constant 1.000000e-24 : f32
    %14 = vector.broadcast %cst_9 : f32 to vector<1x8xf32>
    %15 = arith.maximumf %8, %14 : vector<1x8xf32>
    %16 = math.rsqrt %15 : vector<1x8xf32>
    %17 = arith.mulf %13, %16 : vector<1x8xf32>
    %c0_10 = arith.constant 0 : index
    %18 = memref.load %arg5[%c0_10] : memref<1xf32, #tpu.memory_space<smem>>
    %19 = vector.broadcast %18 : f32 to vector<1x8xf32>
    %20 = arith.addf %17, %19 : vector<1x8xf32>
    %c0_11 = arith.constant 0 : index
    %c0_12 = arith.constant 0 : index
    %21 = vector.load %arg6[%c0_11, %c0_12] : memref<1x8xf32, #tpu.memory_space<vmem>>, vector<1x8xf32>
    tpu.vector_store %arg6[%c0_11, %c0_12], %20 {strides = array<i32>} : memref<1x8xf32, #tpu.memory_space<vmem>>, vector<1x8xf32>,
    return
  }
  func.func @transform_0(%arg0: i32) -> (i32, i32) {
    %c0_i32 = arith.constant 0 : i32
    %c0_i32_0 = arith.constant 0 : i32
    return %arg0, %c0_i32 : i32, i32
  }
  func.func @transform_1(%arg0: i32) -> (i32, i32) {
    %c0_i32 = arith.constant 0 : i32
    %c0_i32_0 = arith.constant 0 : i32
    %c0_i32_1 = arith.constant 0 : i32
    return %c0_i32, %c0_i32_0 : i32, i32
  }
  func.func @transform_2(%arg0: i32) -> (i32, i32) {
    %c0_i32 = arith.constant 0 : i32
    %c0_i32_0 = arith.constant 0 : i32
    %c0_i32_1 = arith.constant 0 : i32
    return %c0_i32, %c0_i32_0 : i32, i32
  }
  func.func @transform_3(%arg0: i32) -> (i32, i32) {
    %c0_i32 = arith.constant 0 : i32
    %c0_i32_0 = arith.constant 0 : i32
    %c0_i32_1 = arith.constant 0 : i32
    return %c0_i32, %c0_i32_0 : i32, i32
  }
  func.func @transform_4(%arg0: i32) -> i32 {
    %c0_i32 = arith.constant 0 : i32
    %c0_i32_0 = arith.constant 0 : i32
    return %c0_i32 : i32
  }
  func.func @transform_5(%arg0: i32) -> (i32, i32) {
    %c0_i32 = arith.constant 0 : i32
    %c0_i32_0 = arith.constant 0 : i32
    return %c0_i32, %arg0 : i32, i32
  }
}

</mosaic_0001>

<llo_original>
// kernel: tpu_custom_call.1
$region0: #{tpu_custom_call.1}
  #allocation0 [shape = 'u32[]', space=smem, size = 0x4, offset = 0x4, fixed_abs, tag = 'smem constant byte address 0x4 - core index']
  #allocation1 [shape = 'u32[144,128]{1,0:T(1,128)}', space=vmem, size = 0x12000, scoped, tag = 'internal scratch']
  #allocation2 [shape = 'f32[1]{0:T(128)S(6)}', space=smem, size = 0x200, scoped, tag = 'scoped memory for tpu_custom_call.1']
  %s0 = inlined_call_operand.vmem [shape: f32[8,32], index: 0, kind: input, shape index: {}]
  %s1 = inlined_call_operand.vmem [shape: f32[32,32], index: 1, kind: input, shape index: {}]
  %s2 = inlined_call_operand.vmem [shape: f32[32,1], index: 2, kind: input, shape index: {}]
  %s3 = inlined_call_operand.vmem [shape: f32[32,1], index: 3, kind: input, shape index: {}]
  %s4 = inlined_call_operand.<no memory space> [shape: f32[1], index: 4, kind: input, shape index: {}]
  %s5 = inlined_call_operand.hbm [shape: f32[1,8], index: 5, kind: output, shape index: {}]
  %s6 = sld [smem:[#allocation0]]
  $region30: #{tpu_custom_call.1} parent=0
    _
  %s8 = ssub.s32 1, %s6
  %s9 = scalar_select 0, %s8, %s6
  %10 = sst [smem:[#allocation2]] %s4
  $region1: #{tpu_custom_call.1} parent=0
    #allocation3 [shape = 'u8[512]{0}', space=vmem, size = 0x400, scoped, tag = 'output window, operand 0, single buffered']
    #allocation4 [shape = 's32[1]{0}', space=sflag, size = 0x4, scoped, tag = 'scoped memory for tpu_custom_call.1']
    %11 = vsyncpa [#allocation4], 0
    // Predicated region
    $region2: #{tpu_custom_call.1} parent=1 // pred_check
      _
    $region3: #{tpu_custom_call.1} parent=1 // pred_check_branch
      %13 = sbr.rel (0) target = $region5
    $region4: #{tpu_custom_call.1} parent=1 // pred_region
      _
    $region5: #{tpu_custom_call.1} parent=1 // pred_fallthru
      _
    // Predicated region
    $region6: #{tpu_custom_call.1} parent=1 // pred_check
      _
    $region7: #{tpu_custom_call.1} parent=1 // pred_check_branch
      %15 = sbr.rel (0) target = $region9
    $region8: #{tpu_custom_call.1} parent=1 // pred_region
      _
    $region9: #{tpu_custom_call.1} parent=1 // pred_fallthru
      _
    // Predicated region
    $region10: #{tpu_custom_call.1} parent=1 // pred_check
      _
    $region11: #{tpu_custom_call.1} parent=1 // pred_check_branch
      %17 = sbr.rel (0) target = $region13
    $region12: #{tpu_custom_call.1} parent=1 // pred_region
      _
    $region13: #{tpu_custom_call.1} parent=1 // pred_fallthru
      _
    // Predicated region
    $region14: #{tpu_custom_call.1} parent=1 // pred_check
      _
    $region15: #{tpu_custom_call.1} parent=1 // pred_check_branch
      %19 = sbr.rel (0) target = $region17
    $region16: #{tpu_custom_call.1} parent=1 // pred_region
      _
    $region17: #{tpu_custom_call.1} parent=1 // pred_fallthru
      _
    // Predicated region
    $region18: #{tpu_custom_call.1} parent=1 // pred_check
      _
    $region19: #{tpu_custom_call.1} parent=1 // pred_check_branch
      %21 = sbr.rel (0) target = $region21
    $region20: #{tpu_custom_call.1} parent=1 // pred_region
      _
    $region21: #{tpu_custom_call.1} parent=1 // pred_fallthru
      _
    %v22 = vld [vmem:[%s0] sm:$0xff]
    %v23 = vld [vmem:[%s1] sm:$0xff]
    %v24 = vld [vmem:[%s1 + $0x8] sm:$0xff]
    %v25 = vld [vmem:[%s1 + $0x10] sm:$0xff]
    %v26 = vld [vmem:[%s1 + $0x18] sm:$0xff]
    %v27 = vld [vmem:[%s2] sm:$0xff]
    %v28 = vld [vmem:[%s2 + $0x8] sm:$0xff]
    %v29 = vld [vmem:[%s2 + $0x10] sm:$0xff]
    %v30 = vld [vmem:[%s2 + $0x18] sm:$0xff]
    %32 = vset.pattern.permute.xlu0 0
    %33 = vperm.xlu0 %32, %v27
    %v34 = vpop.permute.xlu0 %33
    %37 = vset.pattern.permute.xlu0 0
    %38 = vperm.xlu0 %37, %v28
    %v39 = vpop.permute.xlu0 %38
    %42 = vset.pattern.permute.xlu0 0
    %43 = vperm.xlu0 %42, %v29
    %v44 = vpop.permute.xlu0 %43
    %47 = vset.pattern.permute.xlu0 0
    %48 = vperm.xlu0 %47, %v30
    %v49 = vpop.permute.xlu0 %48
    %vm51 = vcmask 261120
    %v53 = vsel %vm51, %v23, 0
    %v56 = vsel %vm51, %v24, 0
    %v59 = vsel %vm51, %v25, 0
    %v62 = vsel %vm51, %v26, 0
    %v65 = vsel %vm51, %v22, 0
    %67 = vmatprep.subr.mxu0 0.0
    %68 = vmatpush1.xpose.msra.mxu0 %v65
    %69 = vmatprep.subr.mxu0 0.0
    %70 = vmatpush1.xpose.msra.mxu0 0.0
    %71 = vmatprep.subr.mxu0 0.0
    %72 = vmatpush1.xpose.msra.mxu0 0.0
    %73 = vmatprep.subr.mxu0 0.0
    %74 = vmatpush1.xpose.msra.mxu0 0.0
    %75 = vmatprep.subr.mxu0 0.0
    %76 = vmatpush1.xpose.msra.mxu0 0.0
    %77 = vmatprep.subr.mxu0 0.0
    %78 = vmatpush1.xpose.msra.mxu0 0.0
    %79 = vmatprep.subr.mxu0 0.0
    %80 = vmatpush1.xpose.msra.mxu0 0.0
    %81 = vmatprep.subr.mxu0 0.0
    %82 = vmatpush1.xpose.msra.mxu0 0.0
    %83 = vmatprep.subr.mxu0 0.0
    %84 = vmatpush1.xpose.msra.mxu0 0.0
    %85 = vmatprep.subr.mxu0 0.0
    %86 = vmatpush1.xpose.msra.mxu0 0.0
    %87 = vmatprep.subr.mxu0 0.0
    %88 = vmatpush1.xpose.msra.mxu0 0.0
    %89 = vmatprep.subr.mxu0 0.0
    %90 = vmatpush1.xpose.msra.mxu0 0.0
    %91 = vmatprep.subr.mxu0 0.0
    %92 = vmatpush1.xpose.msra.mxu0 0.0
    %93 = vmatprep.subr.mxu0 0.0
    %94 = vmatpush1.xpose.msra.mxu0 0.0
    %95 = vmatprep.subr.mxu0 0.0
    %96 = vmatpush1.xpose.msra.mxu0 0.0
    %97 = vmatprep.subr.mxu0 0.0
    %98 = vmatpush1.xpose.msra.mxu0 0.0
    %99 = vmatprep.subr.mxu0 0.0
    %100 = vmatpush1.xpose.msra.mxu0 0.0
    %101 = vmatprep.subr.mxu0 0.0
    %102 = vmatpush1.xpose.msra.mxu0 0.0
    %103 = vmatprep.subr.mxu0 0.0
    %104 = vmatpush1.xpose.msra.mxu0 0.0
    %105 = vmatprep.subr.mxu0 0.0
    %106 = vmatpush1.xpose.msra.mxu0 0.0
    %107 = vmatprep.subr.mxu0 0.0
    %108 = vmatpush1.xpose.msra.mxu0 0.0
    %109 = vmatprep.subr.mxu0 0.0
    %110 = vmatpush1.xpose.msra.mxu0 0.0
    %111 = vmatprep.subr.mxu0 0.0
    %112 = vmatpush1.xpose.msra.mxu0 0.0
    %113 = vmatprep.subr.mxu0 0.0
    %114 = vmatpush1.xpose.msra.mxu0 0.0
    %115 = vmatprep.subr.mxu0 0.0
    %116 = vmatpush1.xpose.msra.mxu0 0.0
    %117 = vmatprep.subr.mxu0 0.0
    %118 = vmatpush1.xpose.msra.mxu0 0.0
    %119 = vmatprep.subr.mxu0 0.0
    %120 = vmatpush1.xpose.msra.mxu0 0.0
    %121 = vmatprep.subr.mxu0 0.0
    %122 = vmatpush1.xpose.msra.mxu0 0.0
    %123 = vmatprep.subr.mxu0 0.0
    %124 = vmatpush1.xpose.msra.mxu0 0.0
    %125 = vmatprep.subr.mxu0 0.0
    %126 = vmatpush1.xpose.msra.mxu0 0.0
    %127 = vmatprep.subr.mxu0 0.0
    %128 = vmatpush1.xpose.msra.mxu0 0.0
    %129 = vmatprep.subr.mxu0 0.0
    %130 = vmatpush1.xpose.msra.mxu0 0.0
    %131 = vmatprep.mubr.f32.mxu0 0.0
    %132 = vmatmul.mubr.f32.gmra.mrb[0].mxu0 %v53
    %v133 = vpop.f32.mrb[0].mxu0
    %v134 = vadd.f32 %v34, %v133
    %v135 = vpop.f32.mrb[0].mxu0
    %136 = vmatprep.mubr.f32.mxu0 0.0
    %137 = vmatmul.mubr.f32.gmra.mrb[0].mxu0 %v56
    %v138 = vpop.f32.mrb[0].mxu0
    %v139 = vadd.f32 %v39, %v138
    %v140 = vpop.f32.mrb[0].mxu0
    %141 = vmatprep.mubr.f32.mxu0 0.0
    %142 = vmatmul.mubr.f32.gmra.mrb[0].mxu0 %v59
    %v143 = vpop.f32.mrb[0].mxu0
    %v144 = vadd.f32 %v44, %v143
    %v145 = vpop.f32.mrb[0].mxu0
    %146 = vmatprep.mubr.f32.mxu0 0.0
    %147 = vmatmul.mubr.f32.gmra.mrb[0].mxu0 %v62
    %v148 = vpop.f32.mrb[0].mxu0
    %v149 = vadd.f32 %v49, %v148
    %v150 = vpop.f32.mrb[0].mxu0
    %151 = vdwg.mxu0
    %v152 = vmul.f32 %v134, %v134
    %v153 = vmul.f32 %v139, %v139
    %v154 = vmul.f32 %v144, %v144
    %v155 = vmul.f32 %v149, %v149
    %vm156 = vcmask 64512
    %v157 = vsel %vm156, %v152, 0.0
    %v158 = vsel %vm156, %v153, 0.0
    %v159 = vadd.f32 %v157, %v158
    %v160 = vsel %vm156, %v154, 0.0
    %v161 = vadd.f32 %v159, %v160
    %v162 = vsel %vm156, %v155, 0.0
    %v163 = vadd.f32 %v161, %v162
    %v164 = vrot.slane %v163, 4
    %v165 = vadd.f32 %v163, %v164
    %v166 = vrot.slane %v165, 2
    %v167 = vadd.f32 %v165, %v166
    %v168 = vrot.slane %v167, 1
    %v169 = vadd.f32 %v167, %v168
    %v170 = vld [vmem:[%s3] sm:$0xff]
    %v171 = vld [vmem:[%s3 + $0x8] sm:$0xff]
    %v172 = vld [vmem:[%s3 + $0x10] sm:$0xff]
    %v173 = vld [vmem:[%s3 + $0x18] sm:$0xff]
    %175 = vset.pattern.permute.xlu0 0
    %176 = vperm.xlu0 %175, %v170
    %v177 = vpop.permute.xlu0 %176
    %180 = vset.pattern.permute.xlu0 0
    %181 = vperm.xlu0 %180, %v171
    %v182 = vpop.permute.xlu0 %181
    %185 = vset.pattern.permute.xlu0 0
    %186 = vperm.xlu0 %185, %v172
    %v187 = vpop.permute.xlu0 %186
    %190 = vset.pattern.permute.xlu0 0
    %191 = vperm.xlu0 %190, %v173
    %v192 = vpop.permute.xlu0 %191
    %v194 = vmul.f32 %v134, %v177
    %v195 = vmul.f32 %v139, %v182
    %v196 = vmul.f32 %v144, %v187
    %v197 = vmul.f32 %v149, %v192
    %v198 = vsel %vm156, %v194, 0.0
    %v199 = vsel %vm156, %v195, 0.0
    %v200 = vadd.f32 %v198, %v199
    %v201 = vsel %vm156, %v196, 0.0
    %v202 = vadd.f32 %v200, %v201
    %v203 = vsel %vm156, %v197, 0.0
    %v204 = vadd.f32 %v202, %v203
    %v205 = vrot.slane %v204, 4
    %v206 = vadd.f32 %v204, %v205
    %v207 = vrot.slane %v206, 2
    %v208 = vadd.f32 %v206, %v207
    %v209 = vrot.slane %v208, 1
    %v210 = vadd.f32 %v208, %v209
    %v211 = vmax.f32 %v169, 1e-24
    %v212 = vrsqrt.pop %v211
    %v213 = vmul.f32 %v210, %v212
    %s214 = sld [smem:[#allocation2]]
    %v215 = vstv %s214
    %v216 = vadd.f32 %v213, %v215
    %vm217 = vcmask 57344
    %218 = vst.msk [vmem:[#allocation3] sm:$0x1] %vm217, %v216
    // Predicated region
    $region22: #{tpu_custom_call.1} parent=1 // pred_check
      _
    $region23: #{tpu_custom_call.1} parent=1 // pred_check_branch
      %220 = sbr.rel (0) target = $region25
    $region24: #{tpu_custom_call.1} parent=1 // pred_region
      %s222 = ssub.s32 16, 16
      %223 = vsyncadd [#allocation4], %s222
      %s225 = sshll.u32 [#allocation3], 4
      %s226 = int_to_ptr.vmem [resolvable:$true] %s225
      %228 = dma.vmem_to_hbm [thread:$0]  %s226, 16, %s5, [#allocation4]
    $region25: #{tpu_custom_call.1} parent=1 // pred_fallthru
      _
    // Predicated region
    $region26: #{tpu_custom_call.1} parent=1 // pred_check
      _
    $region27: #{tpu_custom_call.1} parent=1 // pred_check_branch
      %230 = sbr.rel (0) target = $region29
    $region28: #{tpu_custom_call.1} parent=1 // pred_region
      %231 = dma.done [#allocation4], 16
    $region29: #{tpu_custom_call.1} parent=1 // pred_fallthru
      _
    %232 = vsyncpa [#allocation4], 1

</llo_original>
